<compile_context>
chip_gen: v7x
topology: tpu7x:2x2x1
jax: 0.10.0
libtpu: 0.0.40
codegen_flags: <defaults>
</compile_context>

<pallas_src>
import jax
import jax.numpy as jnp
import numpy as np
from jax.experimental import pallas as pl
from jax.experimental.pallas import tpu as pltpu


_VMEM_LIMIT = 32 * 1024 * 1024  # safe on v5e/v6e (128 MiB) and v7x (64 MiB physical)


def _pick_tile(n, candidates=(512, 256, 128, 64, 32, 16, 8)):
    """Largest candidate tile (multiple of 8) that divides n, else the full dim."""
    for c in candidates:
        if c <= n and n % c == 0:
            return c
    return n


# ---------------------------------------------------------------------------
# Kernel 1: row-tiled linear projection  y = x @ W + b
# Caller folds batch into the row dimension so the MXU gets full row tiles.
# ---------------------------------------------------------------------------
def _linear_kernel(x_ref, w_ref, b_ref, y_ref):
    y = jnp.dot(x_ref[...], w_ref[...], preferred_element_type=jnp.float32)
    y_ref[...] = (y + b_ref[...]).astype(y_ref.dtype)


def _linear_rows(x, w, b, out_dtype=jnp.float32):
    R, D = x.shape
    H = w.shape[1]
    rt = _pick_tile(R)
    grid = (R // rt,)

    cost = pl.CostEstimate(
        flops=int(2 * R * D * H),
        transcendentals=0,
        bytes_accessed=int(x.size * x.dtype.itemsize
                           + w.size * w.dtype.itemsize
                           + b.size * b.dtype.itemsize
                           + R * H * jnp.dtype(out_dtype).itemsize))

    return pl.pallas_call(
        _linear_kernel,
        out_shape=jax.ShapeDtypeStruct((R, H), out_dtype),
        grid_spec=pltpu.PrefetchScalarGridSpec(
            num_scalar_prefetch=0,
            grid=grid,
            in_specs=[
                pl.BlockSpec((rt, D), lambda i: (i, 0)),
                pl.BlockSpec((D, H), lambda i: (0, 0)),
                pl.BlockSpec((1, H), lambda i: (0, 0)),
            ],
            out_specs=pl.BlockSpec((rt, H), lambda i: (i, 0)),
        ),
        compiler_params=pltpu.CompilerParams(
            dimension_semantics=("parallel",),
            vmem_limit_bytes=_VMEM_LIMIT),
        cost_estimate=cost,
    )(x, w, b)


# ---------------------------------------------------------------------------
# Kernel 2: per (batch, Q-tile) additive-attention scores + softmax + w @ memory
# ---------------------------------------------------------------------------
def _make_attn_kernel(m_chunk):
    def kernel(qh_ref, mh_ref, mem_ref, v_ref, out_ref, attn_ref, scores):
        # qh_ref:(QT,H)  mh_ref:(M,H)  mem_ref:(M,Dm)  v_ref:(1,H)
        # out_ref:(QT,Dm)  attn_ref:(QT,M)  scores:(QT,M) f32 VMEM scratch
        m_total = mh_ref.shape[0]
        qh = qh_ref[...]            # (QT, H) f32
        v = v_ref[...]              # (1, H)  f32

        # Bounded tanh slabs: only (QT, mt, H) is live at a time (never (Q,M,H)).
        for start in range(0, m_total, m_chunk):
            mt = min(m_chunk, m_total - start)
            mh_c = mh_ref[start:start + mt, :]                     # (mt, H)
            slab = jnp.tanh(qh[:, None, :] + mh_c[None, :, :])     # (QT, mt, H)
            # v-weighted reduction over H (VPU mul + lane reduce; robust lowering).
            scores[:, start:start + mt] = jnp.sum(slab * v, axis=-1)

        # Softmax over the memory axis (f32).
        s = scores[...]
        s_max = jnp.max(s, axis=-1, keepdims=True)
        e = jnp.exp(s - s_max)
        denom = jnp.sum(e, axis=-1, keepdims=True)
        weights = e * pl.reciprocal(denom, approx=True)             # EUP

        attn_ref[...] = weights.astype(attn_ref.dtype)
        mem = mem_ref[...]
        out_ref[...] = jnp.dot(weights.astype(mem.dtype), mem,
                               preferred_element_type=jnp.float32
                               ).astype(out_ref.dtype)

        # TODO(synk): the optional `mask` argument of the PyTorch forward is not
        # implemented (mask=None assumed); masked positions would need -inf
        # added to `scores` before the softmax.
    return kernel


def mlp_attention(query, memory, wq_t, bq, wm_t, v_row, *,
                  compute_dtype=jnp.float32, m_chunk=512):
    """MLP ('Bahdanau') attention. Linear weights are pre-transposed to (in, out)."""
    B, Q, Dq = query.shape
    _, M, Dm = memory.shape
    H = wq_t.shape[1]
    cdt = jnp.dtype(compute_dtype)

    # MXU-operand dtype (bf16 halves HBM/VMEM bytes & doubles MXU throughput on
    # v6e/v7x); accumulation and the tanh/softmax path stay f32.
    q_c = query.astype(cdt)
    m_c = memory.astype(cdt)
    wq_c = wq_t.astype(cdt)
    wm_c = wm_t.astype(cdt)
    v_f32 = v_row.reshape(1, H).astype(jnp.float32)
    bq_f32 = bq.reshape(1, H).astype(jnp.float32)
    zeros_b = jnp.zeros((1, H), jnp.float32)

    # Projections with batch folded into the MXU row dimension (weights are
    # batch-invariant, so (B*L, D) @ (D, H) is exact).
    qh = _linear_rows(q_c.reshape(B * Q, Dq), wq_c, bq_f32).reshape(B, Q, H)
    mh = _linear_rows(m_c.reshape(B * M, Dm), wm_c, zeros_b).reshape(B, M, H)

    qt = _pick_tile(Q)
    grid = (B, Q // qt)

    cost = pl.CostEstimate(
        flops=int(3 * B * Q * M * H + 2 * B * Q * M * Dm + 4 * B * Q * M),
        transcendentals=int(B * Q * M * H + B * Q * M + B * Q),
        bytes_accessed=int(4 * (qh.size + mh.size)
                           + m_c.size * m_c.dtype.itemsize
                           + v_f32.size * 4
                           + 4 * (B * Q * Dm + B * Q * M)))

    grid_spec = pltpu.PrefetchScalarGridSpec(
        num_scalar_prefetch=0,
        grid=grid,
        in_specs=[
            pl.BlockSpec((pl.Squeezed(), qt, H), lambda b, i: (b, i, 0)),   # qh
            pl.BlockSpec((pl.Squeezed(), M, H), lambda b, i: (b, 0, 0)),    # mh
            pl.BlockSpec((pl.Squeezed(), M, Dm), lambda b, i: (b, 0, 0)),   # memory
            pl.BlockSpec((1, H), lambda b, i: (0, 0)),                      # v
        ],
        out_specs=[
            pl.BlockSpec((pl.Squeezed(), qt, Dm), lambda b, i: (b, i, 0)),  # w @ mem
            # Weights block keeps the full M axis on lanes (lane-dense stores
            # whenever M is a multiple of 128; M=8 here is the full dim).
            pl.BlockSpec((pl.Squeezed(), qt, M), lambda b, i: (b, i, 0)),   # weights
        ],
        scratch_shapes=[pltpu.VMEM((qt, M), jnp.float32)],
    )

    out_shapes = (
        jax.ShapeDtypeStruct((B, Q, Dm), jnp.float32),   # weighted memory
        jax.ShapeDtypeStruct((B, Q, M), jnp.float32),    # attention weights
    )

    # NOTE: for very large M (when weights need not be materialized) an
    # online-softmax accumulation over M tiles would avoid the (B,Q,M) writeback.
    return pl.pallas_call(
        _make_attn_kernel(m_chunk),
        out_shape=out_shapes,
        grid_spec=grid_spec,
        compiler_params=pltpu.CompilerParams(
            # Independent batch / Q-tile axes -> shard across the two
            # TensorCores on v7x (neutral on v5e/v6e).
            dimension_semantics=("parallel", "parallel"),
            vmem_limit_bytes=_VMEM_LIMIT),
        cost_estimate=cost,
    )(qh, mh, m_c, v_f32)


def reference_attention(query, memory, wq_t, bq, wm_t, v_row):
    qh = jnp.einsum('bqd,dh->bqh', query, wq_t) + bq[0]
    mh = jnp.einsum('bmd,dh->bmh', memory, wm_t)
    h = jnp.tanh(qh[:, :, None, :] + mh[:, None, :, :])
    attn = jnp.einsum('bqmh,h->bqm', h, v_row[0])
    w = jax.nn.softmax(attn, axis=-1)
    out = jnp.einsum('bqm,bmd->bqd', w, memory)
    return out, w


if __name__ == "__main__":
    # Module defaults: memory_size = hidden_size = query_size
    B, Q, M = 2, 8, 8
    query_size = 32
    memory_size = query_size
    hidden_size = query_size

    key = jax.random.PRNGKey(0)
    k_q, k_m, k_wq, k_bq, k_wm, k_v = jax.random.split(key, 6)

    query = jax.random.normal(k_q, (B, Q, query_size), dtype=jnp.float32)
    memory = jax.random.normal(k_m, (B, M, memory_size), dtype=jnp.float32)

    # nn.Linear weights are (out, in); pre-transpose to (in, out) for the kernel.
    wq_t = (0.1 * jax.random.normal(k_wq, (hidden_size, query_size))).T.astype(jnp.float32)
    bq = (0.1 * jax.random.normal(k_bq, (1, hidden_size))).astype(jnp.float32)
    wm_t = (0.1 * jax.random.normal(k_wm, (hidden_size, memory_size))).T.astype(jnp.float32)
    v_row = (0.1 * jax.random.normal(k_v, (1, hidden_size))).astype(jnp.float32)

    ref_out, ref_w = reference_attention(query, memory, wq_t, bq, wm_t, v_row)

    # f32 path (approx reciprocal => slightly relaxed tolerance vs. 1e-5)
    out_f32, w_f32 = mlp_attention(query, memory, wq_t, bq, wm_t, v_row,
                                   compute_dtype=jnp.float32)
    out_f32 = jax.block_until_ready(out_f32)
    w_f32 = jax.block_until_ready(w_f32)
    assert out_f32.shape == (B, Q, memory_size)
    assert w_f32.shape == (B, Q, M)
    np.testing.assert_allclose(np.asarray(out_f32), np.asarray(ref_out),
                               rtol=5e-3, atol=5e-3)
    np.testing.assert_allclose(np.asarray(w_f32), np.asarray(ref_w),
                               rtol=5e-3, atol=5e-3)

    print("KERNEL_OK")
</pallas_src>

<mosaic_0001>
module attributes {stable_mosaic.version = 11 : i64} {
  func.func @_linear_kernel(%arg0: i32, %arg1: memref<16x32xf32, #tpu.memory_space<vmem>>, %arg2: memref<32x32xf32, #tpu.memory_space<vmem>>, %arg3: memref<1x32xf32, #tpu.memory_space<vmem>>, %arg4: memref<16x32xf32, #tpu.memory_space<vmem>>) attributes {dimension_semantics = [#tpu.dimension_semantics<parallel>], iteration_bounds = array<i64: 1>, scalar_prefetch = 0 : i64, scratch_operands = 0 : i64, tpu.core_type = #tpu.core_type<tc>, window_params = [{transform_indices = @transform_0, window_bounds = array<i64: 16, 32>}, {pipeline_mode = #tpu.pipeline_mode<synchronous>, transform_indices = @transform_1, window_bounds = array<i64: 32, 32>}, {pipeline_mode = #tpu.pipeline_mode<synchronous>, transform_indices = @transform_2, window_bounds = array<i64: 1, 32>}, {transform_indices = @transform_3, window_bounds = array<i64: 16, 32>}]} {
    %c0 = arith.constant 0 : index
    %c0_0 = arith.constant 0 : index
    %0 = vector.load %arg1[%c0, %c0_0] : memref<16x32xf32, #tpu.memory_space<vmem>>, vector<16x32xf32>
    %c0_1 = arith.constant 0 : index
    %c0_2 = arith.constant 0 : index
    %1 = vector.load %arg2[%c0_1, %c0_2] : memref<32x32xf32, #tpu.memory_space<vmem>>, vector<32x32xf32>
    %cst = arith.constant dense<0.000000e+00> : vector<16x32xf32>
    %2 = tpu.matmul %0, %1, %cst {dimension_numbers = #tpu.dot_dimension_numbers<[1], [0], [0], [1], [0, 0, 1, 1], [], []>} : vector<16x32xf32>, vector<32x32xf32>, vector<16x32xf32> -> vector<16x32xf32>
    %c0_3 = arith.constant 0 : index
    %c0_4 = arith.constant 0 : index
    %3 = vector.load %arg3[%c0_3, %c0_4] : memref<1x32xf32, #tpu.memory_space<vmem>>, vector<1x32xf32>
    %4 = vector.broadcast %3 : vector<1x32xf32> to vector<16x32xf32>
    %5 = arith.addf %2, %4 : vector<16x32xf32>
    %c0_5 = arith.constant 0 : index
    %c0_6 = arith.constant 0 : index
    %6 = vector.load %arg4[%c0_5, %c0_6] : memref<16x32xf32, #tpu.memory_space<vmem>>, vector<16x32xf32>
    tpu.vector_store %arg4[%c0_5, %c0_6], %5 {strides = array<i32>} : memref<16x32xf32, #tpu.memory_space<vmem>>, vector<16x32xf32>,
    return
  }
  func.func @transform_0(%arg0: i32) -> (i32, i32) {
    %c0_i32 = arith.constant 0 : i32
    %c0_i32_0 = arith.constant 0 : i32
    return %arg0, %c0_i32 : i32, i32
  }
  func.func @transform_1(%arg0: i32) -> (i32, i32) {
    %c0_i32 = arith.constant 0 : i32
    %c0_i32_0 = arith.constant 0 : i32
    %c0_i32_1 = arith.constant 0 : i32
    return %c0_i32, %c0_i32_0 : i32, i32
  }
  func.func @transform_2(%arg0: i32) -> (i32, i32) {
    %c0_i32 = arith.constant 0 : i32
    %c0_i32_0 = arith.constant 0 : i32
    %c0_i32_1 = arith.constant 0 : i32
    return %c0_i32, %c0_i32_0 : i32, i32
  }
  func.func @transform_3(%arg0: i32) -> (i32, i32) {
    %c0_i32 = arith.constant 0 : i32
    %c0_i32_0 = arith.constant 0 : i32
    return %arg0, %c0_i32 : i32, i32
  }
}

</mosaic_0001>

<llo_original>
// kernel: tpu_custom_call.1
$region0: #{tpu_custom_call.1}
  #allocation0 [shape = 'u32[]', space=smem, size = 0x4, offset = 0x4, fixed_abs, tag = 'smem constant byte address 0x4 - core index']
  #allocation1 [shape = 'u32[144,128]{1,0:T(1,128)}', space=vmem, size = 0x12000, scoped, tag = 'internal scratch']
  %s0 = inlined_call_operand.hbm [shape: f32[16,32], index: 0, kind: input, shape index: {}]
  %s1 = inlined_call_operand.hbm [shape: f32[32,32], index: 1, kind: input, shape index: {}]
  %s2 = inlined_call_operand.vmem [shape: f32[1,32], index: 2, kind: input, shape index: {}]
  %s3 = inlined_call_operand.hbm [shape: f32[16,32], index: 3, kind: output, shape index: {}]
  %s4 = sld [smem:[#allocation0]]
  $region30: #{tpu_custom_call.1} parent=0
    _
  %s6 = ssub.s32 1, %s4
  %s7 = scalar_select 0, %s6, %s4
  $region1: #{tpu_custom_call.1} parent=0
    #allocation2 [shape = 'u8[8192]{0}', space=vmem, size = 0x2000, scoped, tag = 'input window, operand 0, single buffered']
    #allocation3 [shape = 's32[1]{0}', space=sflag, size = 0x4, scoped, tag = 'scoped memory for tpu_custom_call.1']
    #allocation4 [shape = 's32[1]{0}', space=sflag, size = 0x4, scoped, tag = 'scoped memory for tpu_custom_call.1']
    #allocation5 [shape = 'u8[16384]{0}', space=vmem, size = 0x4000, scoped, tag = 'input window, operand 1, single buffered']
    #allocation6 [shape = 's32[1]{0}', space=sflag, size = 0x4, scoped, tag = 'scoped memory for tpu_custom_call.1']
    #allocation7 [shape = 'u8[8192]{0}', space=vmem, size = 0x2000, scoped, tag = 'output window, operand 0, single buffered']
    %8 = vsyncpa [#allocation3], 0
    %9 = vsyncpa [#allocation6], 0
    %10 = vsyncpa [#allocation4], 0
    // Predicated region
    $region2: #{tpu_custom_call.1} parent=1 // pred_check
      _
    $region3: #{tpu_custom_call.1} parent=1 // pred_check_branch
      %12 = sbr.rel (0) target = $region5
    $region4: #{tpu_custom_call.1} parent=1 // pred_region
      %s14 = ssub.s32 256, 256
      %15 = vsyncadd [#allocation3], %s14
      %s16 = sshll.u32 [#allocation2], 4
      %s17 = int_to_ptr.vmem [resolvable:$true] %s16
      %22 = dma.hbm_to_vmem [thread:$0]  %s0, 256, %s17, [#allocation3], 128, 128, 8
    $region5: #{tpu_custom_call.1} parent=1 // pred_fallthru
      _
    // Predicated region
    $region6: #{tpu_custom_call.1} parent=1 // pred_check
      _
    $region7: #{tpu_custom_call.1} parent=1 // pred_check_branch
      %24 = sbr.rel (0) target = $region9
    $region8: #{tpu_custom_call.1} parent=1 // pred_region
      %s26 = ssub.s32 512, 512
      %27 = vsyncadd [#allocation6], %s26
      %s28 = sshll.u32 [#allocation5], 4
      %s29 = int_to_ptr.vmem [resolvable:$true] %s28
      %34 = dma.hbm_to_vmem [thread:$0]  %s1, 512, %s29, [#allocation6], 128, 128, 8
    $region9: #{tpu_custom_call.1} parent=1 // pred_fallthru
      _
    // Predicated region
    $region10: #{tpu_custom_call.1} parent=1 // pred_check
      _
    $region11: #{tpu_custom_call.1} parent=1 // pred_check_branch
      %36 = sbr.rel (0) target = $region13
    $region12: #{tpu_custom_call.1} parent=1 // pred_region
      _
    $region13: #{tpu_custom_call.1} parent=1 // pred_fallthru
      _
    // Predicated region
    $region14: #{tpu_custom_call.1} parent=1 // pred_check
      _
    $region15: #{tpu_custom_call.1} parent=1 // pred_check_branch
      %38 = sbr.rel (0) target = $region17
    $region16: #{tpu_custom_call.1} parent=1 // pred_region
      %39 = dma.done [#allocation3], 256
    $region17: #{tpu_custom_call.1} parent=1 // pred_fallthru
      _
    // Predicated region
    $region18: #{tpu_custom_call.1} parent=1 // pred_check
      _
    $region19: #{tpu_custom_call.1} parent=1 // pred_check_branch
      %41 = sbr.rel (0) target = $region21
    $region20: #{tpu_custom_call.1} parent=1 // pred_region
      %42 = dma.done [#allocation6], 512
    $region21: #{tpu_custom_call.1} parent=1 // pred_fallthru
      _
    %v43 = vld [vmem:[#allocation2] sm:$0xff]
    %v44 = vld [vmem:[#allocation2 + $0x8] sm:$0xff]
    %v45 = vld [vmem:[#allocation5] sm:$0xff]
    %v46 = vld [vmem:[#allocation5 + $0x8] sm:$0xff]
    %v47 = vld [vmem:[#allocation5 + $0x10] sm:$0xff]
    %v48 = vld [vmem:[#allocation5 + $0x18] sm:$0xff]
    %v49 = vld [vmem:[%s2] sm:$0x1]
    %v51 = vlaneseq
    %v52 = vshrl.u32 %v51, 7
    %v53 = vsub.s32 0, %v52
    %v54 = vrot.slane %v49, %v53
    %vm56 = vcmask 261120
    %v58 = vsel %vm56, %v43, 0
    %v61 = vsel %vm56, %v44, 0
    %63 = vmatprep.subr.mxu0 0.0
    %64 = vmatpush1.msra.mxu0 %v45
    %65 = vmatprep.subr.mxu0 0.0
    %66 = vmatpush1.msra.mxu0 %v46
    %67 = vmatprep.subr.mxu0 0.0
    %68 = vmatpush1.msra.mxu0 %v47
    %69 = vmatprep.subr.mxu0 0.0
    %70 = vmatpush1.msra.mxu0 %v48
    %71 = vmatprep.subr.mxu0 0.0
    %72 = vmatpush1.msra.mxu0 0.0
    %73 = vmatprep.subr.mxu0 0.0
    %74 = vmatpush1.msra.mxu0 0.0
    %75 = vmatprep.subr.mxu0 0.0
    %76 = vmatpush1.msra.mxu0 0.0
    %77 = vmatprep.subr.mxu0 0.0
    %78 = vmatpush1.msra.mxu0 0.0
    %79 = vmatprep.subr.mxu0 0.0
    %80 = vmatpush1.msra.mxu0 0.0
    %81 = vmatprep.subr.mxu0 0.0
    %82 = vmatpush1.msra.mxu0 0.0
    %83 = vmatprep.subr.mxu0 0.0
    %84 = vmatpush1.msra.mxu0 0.0
    %85 = vmatprep.subr.mxu0 0.0
    %86 = vmatpush1.msra.mxu0 0.0
    %87 = vmatprep.subr.mxu0 0.0
    %88 = vmatpush1.msra.mxu0 0.0
    %89 = vmatprep.subr.mxu0 0.0
    %90 = vmatpush1.msra.mxu0 0.0
    %91 = vmatprep.subr.mxu0 0.0
    %92 = vmatpush1.msra.mxu0 0.0
    %93 = vmatprep.subr.mxu0 0.0
    %94 = vmatpush1.msra.mxu0 0.0
    %95 = vmatprep.subr.mxu0 0.0
    %96 = vmatpush1.msra.mxu0 0.0
    %97 = vmatprep.subr.mxu0 0.0
    %98 = vmatpush1.msra.mxu0 0.0
    %99 = vmatprep.subr.mxu0 0.0
    %100 = vmatpush1.msra.mxu0 0.0
    %101 = vmatprep.subr.mxu0 0.0
    %102 = vmatpush1.msra.mxu0 0.0
    %103 = vmatprep.subr.mxu0 0.0
    %104 = vmatpush1.msra.mxu0 0.0
    %105 = vmatprep.subr.mxu0 0.0
    %106 = vmatpush1.msra.mxu0 0.0
    %107 = vmatprep.subr.mxu0 0.0
    %108 = vmatpush1.msra.mxu0 0.0
    %109 = vmatprep.subr.mxu0 0.0
    %110 = vmatpush1.msra.mxu0 0.0
    %111 = vmatprep.subr.mxu0 0.0
    %112 = vmatpush1.msra.mxu0 0.0
    %113 = vmatprep.subr.mxu0 0.0
    %114 = vmatpush1.msra.mxu0 0.0
    %115 = vmatprep.subr.mxu0 0.0
    %116 = vmatpush1.msra.mxu0 0.0
    %117 = vmatprep.subr.mxu0 0.0
    %118 = vmatpush1.msra.mxu0 0.0
    %119 = vmatprep.subr.mxu0 0.0
    %120 = vmatpush1.msra.mxu0 0.0
    %121 = vmatprep.subr.mxu0 0.0
    %122 = vmatpush1.msra.mxu0 0.0
    %123 = vmatprep.subr.mxu0 0.0
    %124 = vmatpush1.msra.mxu0 0.0
    %125 = vmatprep.subr.mxu0 0.0
    %126 = vmatpush1.msra.mxu0 0.0
    %127 = vmatprep.mubr.f32.mxu0 0.0
    %128 = vmatmul.mubr.f32.gmra.mrb[0].mxu0 %v58
    %v129 = vpop.f32.mrb[0].mxu0
    %v130 = vadd.f32 %v54, %v129
    %v131 = vpop.f32.mrb[0].mxu0
    %132 = vmatprep.mubr.f32.mxu0 0.0
    %133 = vmatmul.mubr.f32.gmra.mrb[0].mxu0 %v61
    %v134 = vpop.f32.mrb[0].mxu0
    %v135 = vadd.f32 %v54, %v134
    %v136 = vpop.f32.mrb[0].mxu0
    %137 = vdwg.mxu0
    %138 = vst.msk [vmem:[#allocation7] sm:$0xff] %vm56, %v130
    %139 = vst.msk [vmem:[#allocation7 + $0x8] sm:$0xff] %vm56, %v135
    // Predicated region
    $region22: #{tpu_custom_call.1} parent=1 // pred_check
      _
    $region23: #{tpu_custom_call.1} parent=1 // pred_check_branch
      %141 = sbr.rel (0) target = $region25
    $region24: #{tpu_custom_call.1} parent=1 // pred_region
      %s143 = ssub.s32 256, 256
      %144 = vsyncadd [#allocation4], %s143
      %s145 = sshll.u32 [#allocation7], 4
      %s146 = int_to_ptr.vmem [resolvable:$true] %s145
      %151 = dma.vmem_to_hbm [thread:$0]  %s146, 256, %s3, [#allocation4], 128, 128, 8
    $region25: #{tpu_custom_call.1} parent=1 // pred_fallthru
      _
    // Predicated region
    $region26: #{tpu_custom_call.1} parent=1 // pred_check
      _
    $region27: #{tpu_custom_call.1} parent=1 // pred_check_branch
      %153 = sbr.rel (0) target = $region29
    $region28: #{tpu_custom_call.1} parent=1 // pred_region
      %154 = dma.done [#allocation4], 256
    $region29: #{tpu_custom_call.1} parent=1 // pred_fallthru
      _
    %155 = vsyncpa [#allocation3], 1
    %156 = vsyncpa [#allocation6], 1
    %157 = vsyncpa [#allocation4], 1

</llo_original>
